<compile_context>
chip_gen: v7x
topology: tpu7x:2x2x1
jax: 0.10.0
libtpu: 0.0.40
codegen_flags: <defaults>
</compile_context>

<pallas_src>
import functools

import numpy as np
import jax
import jax.numpy as jnp
from jax.experimental import pallas as pl
from jax.experimental.pallas import tpu as pltpu


def _round_up(x: int, m: int) -> int:
    return ((x + m - 1) // m) * m


@functools.partial(jax.jit, static_argnames=("seq_len", "dim", "out_dtype"))
def _compute_embedding(spatial_indices_sequence, *, seq_len, dim, out_dtype):
    """Build the (seq_len, dim) positional-embedding table with a Pallas kernel."""
    S = seq_len
    assert dim % 2 == 0, "dim must be even (PyTorch cat(sin, cos) width == dim)"
    assert spatial_indices_sequence.shape[0] >= S - 1
    half = dim // 2

    # ---- layout: fold G sequence rows per 128-lane output row when dim < 128 ----
    if dim < 128 and 128 % dim == 0:
        G = 128 // dim
    else:
        G = 1                      # dim >= 128 (lane-dense if dim % 128 == 0) or awkward dim
    L = G * dim                    # lane width of one folded output row
    Kp = _round_up(G, 8)           # MXU contraction dim, padded for alignment

    # ---- tile sizing over folded rows (v5e/v6e/v7x safe: <=4 MiB per output tile) ----
    out_bytes = np.dtype(out_dtype).itemsize
    s_fold_needed = -(-S // G)
    max_ft = max(16, ((4 * 1024 * 1024) // (L * out_bytes)) // 16 * 16)
    FT = max(16, min(max_ft, 512, _round_up(s_fold_needed, 16)))   # multiple of 16 (bf16-safe)
    S_fold = _round_up(s_fold_needed, FT)
    S_pad = S_fold * G
    num_tiles = S_fold // FT

    # ---- tiny host-side constants (these ARE the "buffer init" of the PyTorch module) ----
    # Output row s>=1 uses spatial_indices_sequence[s-1]; row 0 is the zero padding row (pos 0).
    idx = spatial_indices_sequence.astype(jnp.float32)
    shifted = jnp.zeros((S_pad,), jnp.float32).at[1:S].set(idx[: S - 1])
    pos_folded = shifted.reshape(S_fold, G)
    pos_folded = jnp.pad(pos_folded, ((0, 0), (0, Kp - G)))                 # (S_fold, Kp)

    lane = jnp.arange(L, dtype=jnp.int32)
    chan = lane % dim                                                        # channel within a row
    inv_freq = 1.0 / (10000.0 ** (jnp.arange(0, dim, 2, dtype=jnp.float32) / dim))   # (half,)
    invf_ext = inv_freq[chan % half][None, :]                                # (1, L)
    cos_lane = (chan >= half).astype(jnp.float32)[None, :]                   # (1, L): 1 on cos lanes
    expand = (lane[None, :] // dim ==
              jnp.arange(Kp, dtype=jnp.int32)[:, None]).astype(jnp.float32)  # (Kp, L) 0/1 matrix

    def kernel(pos_ref, expand_ref, invf_ref, cosm_ref, out_ref):
        # pos_ext[r, l] = shifted_pos[r*G + l // dim]  (one small MXU matmul; MXU has total slack)
        pos_ext = jnp.dot(pos_ref[...], expand_ref[...],
                          preferred_element_type=jnp.float32)                # (FT, L)
        sinusoid = pos_ext * invf_ref[...]                                   # (FT, L)
        emb = jnp.where(cosm_ref[...] != 0.0, jnp.cos(sinusoid), jnp.sin(sinusoid))
        out_ref[...] = emb.astype(out_ref.dtype)                             # lane-dense full store

        # Row 0 of the overall output is the zero padding row.  Its position is 0, so the sin
        # lanes are already 0; only the cos lanes of that single row need zeroing (first tile only).
        @pl.when(pl.program_id(0) == 0)
        def _():
            out_ref[pl.ds(0, 1), pl.ds(half, half)] = jnp.zeros((1, half), out_ref.dtype)

    out_folded = pl.pallas_call(
        kernel,
        out_shape=jax.ShapeDtypeStruct((S_fold, L), out_dtype),
        grid=(num_tiles,),
        in_specs=[
            pl.BlockSpec((FT, Kp), lambda i: (i, 0)),   # positions (tiny, tiled over rows)
            pl.BlockSpec((Kp, L), lambda i: (0, 0)),    # 0/1 expand matrix (constant block)
            pl.BlockSpec((1, L), lambda i: (0, 0)),     # per-lane inverse frequencies
            pl.BlockSpec((1, L), lambda i: (0, 0)),     # per-lane cos mask
        ],
        out_specs=pl.BlockSpec((FT, L), lambda i: (i, 0)),
        compiler_params=pltpu.CompilerParams(dimension_semantics=("parallel",)),
    )(pos_folded, expand, invf_ext, cos_lane)

    # Unfold (row-major reshape) and drop the padding rows added for tile alignment.
    return out_folded.reshape(S_pad, dim)[:S]


def fixed_spatial_positional_embedding(x, spatial_indices_sequence, dim):
    """JAX/Pallas equivalent of FixedSpatialPositionalEmbedding.forward(x) -> (1, S, dim)."""
    # NOTE: the result is independent of x's values; in a model, call _compute_embedding once at
    # init and reuse the cached table (like the PyTorch register_buffer) instead of per forward.
    emb = _compute_embedding(spatial_indices_sequence,
                             seq_len=x.shape[1], dim=dim, out_dtype=x.dtype)
    return emb[None, :, :]


def _reference(x, spatial_indices_sequence, dim):
    # Pure-JAX mirror of the PyTorch forward path (for verification).
    S = x.shape[1]
    inv_freq = 1.0 / (10000.0 ** (jnp.arange(0, dim, 2, dtype=jnp.float32) / dim))
    pos = spatial_indices_sequence[: S - 1].astype(jnp.float32)
    sinusoid = pos[:, None] * inv_freq[None, :]
    emb = jnp.concatenate([jnp.sin(sinusoid), jnp.cos(sinusoid)], axis=-1)   # (S-1, dim)
    emb = jnp.pad(emb, ((1, 0), (0, 0)))[None]                               # prepend zero row
    return emb.astype(x.dtype)


if __name__ == "__main__":
    key = jax.random.PRNGKey(0)
    k_x, k_idx = jax.random.split(key)

    B, S = 2, 16
    for dim in (32, 128):   # dim=32 exercises the folded lane-dense path (G=4); dim=128 the G=1 path
        x = jax.random.normal(k_x, (B, S, dim), dtype=jnp.float32)
        spatial_indices_sequence = jax.random.randint(k_idx, (S,), 0, 20, dtype=jnp.int32)

        out = fixed_spatial_positional_embedding(x, spatial_indices_sequence, dim)
        out = jax.block_until_ready(out)
        ref = _reference(x, spatial_indices_sequence, dim)

        assert out.shape == (1, S, dim), out.shape
        assert out.dtype == x.dtype
        assert jnp.allclose(out, ref, atol=1e-5, rtol=1e-5), f"mismatch vs reference (dim={dim})"

    print("KERNEL_OK")
</pallas_src>

<mosaic_0001>
module attributes {stable_mosaic.version = 11 : i64} {
  func.func @kernel(%arg0: i32, %arg1: memref<16x8xf32, #tpu.memory_space<vmem>>, %arg2: memref<8x128xf32, #tpu.memory_space<vmem>>, %arg3: memref<1x128xf32, #tpu.memory_space<vmem>>, %arg4: memref<1x128xf32, #tpu.memory_space<vmem>>, %arg5: memref<16x128xf32, #tpu.memory_space<vmem>>) attributes {dimension_semantics = [#tpu.dimension_semantics<parallel>], iteration_bounds = array<i64: 1>, scalar_prefetch = 0 : i64, scratch_operands = 0 : i64, tpu.core_type = #tpu.core_type<tc>, window_params = [{transform_indices = @transform_0, window_bounds = array<i64: 16, 8>}, {pipeline_mode = #tpu.pipeline_mode<synchronous>, transform_indices = @transform_1, window_bounds = array<i64: 8, 128>}, {pipeline_mode = #tpu.pipeline_mode<synchronous>, transform_indices = @transform_2, window_bounds = array<i64: 1, 128>}, {pipeline_mode = #tpu.pipeline_mode<synchronous>, transform_indices = @transform_3, window_bounds = array<i64: 1, 128>}, {transform_indices = @transform_4, window_bounds = array<i64: 16, 128>}]} {
    %c0 = arith.constant 0 : index
    %c0_0 = arith.constant 0 : index
    %0 = vector.load %arg1[%c0, %c0_0] : memref<16x8xf32, #tpu.memory_space<vmem>>, vector<16x8xf32>
    %c0_1 = arith.constant 0 : index
    %c0_2 = arith.constant 0 : index
    %1 = vector.load %arg2[%c0_1, %c0_2] : memref<8x128xf32, #tpu.memory_space<vmem>>, vector<8x128xf32>
    %cst = arith.constant dense<0.000000e+00> : vector<16x128xf32>
    %2 = tpu.matmul %0, %1, %cst {dimension_numbers = #tpu.dot_dimension_numbers<[1], [0], [0], [1], [0, 0, 1, 1], [], []>} : vector<16x8xf32>, vector<8x128xf32>, vector<16x128xf32> -> vector<16x128xf32>
    %c0_3 = arith.constant 0 : index
    %c0_4 = arith.constant 0 : index
    %3 = vector.load %arg3[%c0_3, %c0_4] : memref<1x128xf32, #tpu.memory_space<vmem>>, vector<1x128xf32>
    %4 = vector.broadcast %3 : vector<1x128xf32> to vector<16x128xf32>
    %5 = arith.mulf %2, %4 : vector<16x128xf32>
    %c0_5 = arith.constant 0 : index
    %c0_6 = arith.constant 0 : index
    %6 = vector.load %arg4[%c0_5, %c0_6] : memref<1x128xf32, #tpu.memory_space<vmem>>, vector<1x128xf32>
    %cst_7 = arith.constant 0.000000e+00 : f32
    %7 = vector.broadcast %cst_7 : f32 to vector<1x128xf32>
    %8 = arith.cmpf one, %6, %7 : vector<1x128xf32>
    %9 = math.cos %5 : vector<16x128xf32>
    %10 = math.sin %5 : vector<16x128xf32>
    %11 = vector.shape_cast %8 : vector<1x128xi1> to vector<1x128xi1>
    %12 = vector.broadcast %11 : vector<1x128xi1> to vector<16x128xi1>
    %13 = arith.select %12, %9, %10 : vector<16x128xi1>, vector<16x128xf32>
    %c0_8 = arith.constant 0 : index
    %c0_9 = arith.constant 0 : index
    %14 = vector.load %arg5[%c0_8, %c0_9] : memref<16x128xf32, #tpu.memory_space<vmem>>, vector<16x128xf32>
    tpu.vector_store %arg5[%c0_8, %c0_9], %13 {strides = array<i32>} : memref<16x128xf32, #tpu.memory_space<vmem>>, vector<16x128xf32>,
    %c0_i32 = arith.constant 0 : i32
    %15 = arith.cmpi eq, %arg0, %c0_i32 : i32
    %16 = arith.extui %15 : i1 to i32
    %c0_i32_10 = arith.constant 0 : i32
    %17 = arith.cmpi ne, %16, %c0_i32_10 : i32
    scf.if %17 {
      %cst_11 = arith.constant 0.000000e+00 : f32
      %18 = vector.broadcast %cst_11 : f32 to vector<1x16xf32>
      %c0_12 = arith.constant 0 : index
      %c16 = arith.constant 16 : index
      %19 = vector.load %arg5[%c0_12, %c16] : memref<16x128xf32, #tpu.memory_space<vmem>>, vector<1x16xf32>
      tpu.vector_store %arg5[%c0_12, %c16], %18 {strides = array<i32>} : memref<16x128xf32, #tpu.memory_space<vmem>>, vector<1x16xf32>,
    } else {
    }
    return
  }
  func.func @transform_0(%arg0: i32) -> (i32, i32) {
    %c0_i32 = arith.constant 0 : i32
    %c0_i32_0 = arith.constant 0 : i32
    return %arg0, %c0_i32 : i32, i32
  }
  func.func @transform_1(%arg0: i32) -> (i32, i32) {
    %c0_i32 = arith.constant 0 : i32
    %c0_i32_0 = arith.constant 0 : i32
    %c0_i32_1 = arith.constant 0 : i32
    return %c0_i32, %c0_i32_0 : i32, i32
  }
  func.func @transform_2(%arg0: i32) -> (i32, i32) {
    %c0_i32 = arith.constant 0 : i32
    %c0_i32_0 = arith.constant 0 : i32
    %c0_i32_1 = arith.constant 0 : i32
    return %c0_i32, %c0_i32_0 : i32, i32
  }
  func.func @transform_3(%arg0: i32) -> (i32, i32) {
    %c0_i32 = arith.constant 0 : i32
    %c0_i32_0 = arith.constant 0 : i32
    %c0_i32_1 = arith.constant 0 : i32
    return %c0_i32, %c0_i32_0 : i32, i32
  }
  func.func @transform_4(%arg0: i32) -> (i32, i32) {
    %c0_i32 = arith.constant 0 : i32
    %c0_i32_0 = arith.constant 0 : i32
    return %arg0, %c0_i32 : i32, i32
  }
}

</mosaic_0001>

<llo_original>
// kernel: _compute_embedding.1
$region0: #{_compute_embedding.1}
  #allocation0 [shape = 'u32[]', space=smem, size = 0x4, offset = 0x4, fixed_abs, tag = 'smem constant byte address 0x4 - core index']
  #allocation1 [shape = 'u32[144,128]{1,0:T(1,128)}', space=vmem, size = 0x12000, scoped, tag = 'internal scratch']
  %s0 = inlined_call_operand.vmem [shape: f32[16,8], index: 0, kind: input, shape index: {}]
  %s1 = inlined_call_operand.vmem [shape: f32[8,128], index: 1, kind: input, shape index: {}]
  %s2 = inlined_call_operand.vmem [shape: f32[1,128], index: 2, kind: input, shape index: {}]
  %s3 = inlined_call_operand.vmem [shape: f32[1,128], index: 3, kind: input, shape index: {}]
  %s4 = inlined_call_operand.vmem [shape: f32[16,128], index: 4, kind: output, shape index: {}]
  %s5 = sld [smem:[#allocation0]]
  $region30: #{_compute_embedding.1} parent=0
    _
  %s7 = ssub.s32 1, %s5
  %s8 = scalar_select 0, %s7, %s5
  // Predicated region
  $region2: #{_compute_embedding.1} parent=0 // pred_check
    _
  $region3: #{_compute_embedding.1} parent=0 // pred_check_branch
    %10 = sbr.rel (0) target = $region5
  $region4: #{_compute_embedding.1} parent=0 // pred_region
    _
  $region5: #{_compute_embedding.1} parent=0 // pred_fallthru
    _
  // Predicated region
  $region6: #{_compute_embedding.1} parent=0 // pred_check
    _
  $region7: #{_compute_embedding.1} parent=0 // pred_check_branch
    %12 = sbr.rel (0) target = $region9
  $region8: #{_compute_embedding.1} parent=0 // pred_region
    _
  $region9: #{_compute_embedding.1} parent=0 // pred_fallthru
    _
  // Predicated region
  $region10: #{_compute_embedding.1} parent=0 // pred_check
    _
  $region11: #{_compute_embedding.1} parent=0 // pred_check_branch
    %14 = sbr.rel (0) target = $region13
  $region12: #{_compute_embedding.1} parent=0 // pred_region
    _
  $region13: #{_compute_embedding.1} parent=0 // pred_fallthru
    _
  // Predicated region
  $region14: #{_compute_embedding.1} parent=0 // pred_check
    _
  $region15: #{_compute_embedding.1} parent=0 // pred_check_branch
    %16 = sbr.rel (0) target = $region17
  $region16: #{_compute_embedding.1} parent=0 // pred_region
    _
  $region17: #{_compute_embedding.1} parent=0 // pred_fallthru
    _
  %v17 = vld [vmem:[%s0] sm:$0xff]
  %v18 = vld [vmem:[%s0 + $0x8] sm:$0xff]
  %v19 = vld [vmem:[%s1] sm:$0xff]
  %vm20 = vcmask 64512
  %v22 = vsel %vm20, %v17, 0
  %v25 = vsel %vm20, %v18, 0
  %27 = vmatprep.subr.mxu0 0.0
  %28 = vmatpush1.msra.mxu0 %v19
  %29 = vmatprep.subr.mxu0 0.0
  %30 = vmatpush1.msra.mxu0 0.0
  %31 = vmatprep.subr.mxu0 0.0
  %32 = vmatpush1.msra.mxu0 0.0
  %33 = vmatprep.subr.mxu0 0.0
  %34 = vmatpush1.msra.mxu0 0.0
  %35 = vmatprep.subr.mxu0 0.0
  %36 = vmatpush1.msra.mxu0 0.0
  %37 = vmatprep.subr.mxu0 0.0
  %38 = vmatpush1.msra.mxu0 0.0
  %39 = vmatprep.subr.mxu0 0.0
  %40 = vmatpush1.msra.mxu0 0.0
  %41 = vmatprep.subr.mxu0 0.0
  %42 = vmatpush1.msra.mxu0 0.0
  %43 = vmatprep.subr.mxu0 0.0
  %44 = vmatpush1.msra.mxu0 0.0
  %45 = vmatprep.subr.mxu0 0.0
  %46 = vmatpush1.msra.mxu0 0.0
  %47 = vmatprep.subr.mxu0 0.0
  %48 = vmatpush1.msra.mxu0 0.0
  %49 = vmatprep.subr.mxu0 0.0
  %50 = vmatpush1.msra.mxu0 0.0
  %51 = vmatprep.subr.mxu0 0.0
  %52 = vmatpush1.msra.mxu0 0.0
  %53 = vmatprep.subr.mxu0 0.0
  %54 = vmatpush1.msra.mxu0 0.0
  %55 = vmatprep.subr.mxu0 0.0
  %56 = vmatpush1.msra.mxu0 0.0
  %57 = vmatprep.subr.mxu0 0.0
  %58 = vmatpush1.msra.mxu0 0.0
  %59 = vmatprep.subr.mxu0 0.0
  %60 = vmatpush1.msra.mxu0 0.0
  %61 = vmatprep.subr.mxu0 0.0
  %62 = vmatpush1.msra.mxu0 0.0
  %63 = vmatprep.subr.mxu0 0.0
  %64 = vmatpush1.msra.mxu0 0.0
  %65 = vmatprep.subr.mxu0 0.0
  %66 = vmatpush1.msra.mxu0 0.0
  %67 = vmatprep.subr.mxu0 0.0
  %68 = vmatpush1.msra.mxu0 0.0
  %69 = vmatprep.subr.mxu0 0.0
  %70 = vmatpush1.msra.mxu0 0.0
  %71 = vmatprep.subr.mxu0 0.0
  %72 = vmatpush1.msra.mxu0 0.0
  %73 = vmatprep.subr.mxu0 0.0
  %74 = vmatpush1.msra.mxu0 0.0
  %75 = vmatprep.subr.mxu0 0.0
  %76 = vmatpush1.msra.mxu0 0.0
  %77 = vmatprep.subr.mxu0 0.0
  %78 = vmatpush1.msra.mxu0 0.0
  %79 = vmatprep.subr.mxu0 0.0
  %80 = vmatpush1.msra.mxu0 0.0
  %81 = vmatprep.subr.mxu0 0.0
  %82 = vmatpush1.msra.mxu0 0.0
  %83 = vmatprep.subr.mxu0 0.0
  %84 = vmatpush1.msra.mxu0 0.0
  %85 = vmatprep.subr.mxu0 0.0
  %86 = vmatpush1.msra.mxu0 0.0
  %87 = vmatprep.subr.mxu0 0.0
  %88 = vmatpush1.msra.mxu0 0.0
  %89 = vmatprep.subr.mxu0 0.0
  %90 = vmatpush1.msra.mxu0 0.0
  %91 = vmatprep.mubr.f32.mxu0 0.0
  %92 = vmatmul.mubr.f32.gmra.mrb[0].mxu0 %v22
  %v93 = vpop.f32.mrb[0].mxu0
  %v94 = vadd.f32 0.0, %v93
  %v95 = vpop.f32.mrb[0].mxu0
  %96 = vmatprep.mubr.f32.mxu0 0.0
  %97 = vmatmul.mubr.f32.gmra.mrb[0].mxu0 %v25
  %v98 = vpop.f32.mrb[0].mxu0
  %v99 = vadd.f32 0.0, %v98
  %v100 = vpop.f32.mrb[0].mxu0
  %101 = vdwg.mxu0
  %v102 = vld [vmem:[%s2] sm:$0x1]
  %v104 = vlaneseq
  %v105 = vshrl.u32 %v104, 7
  %v106 = vsub.s32 0, %v105
  %v107 = vrot.slane %v102, %v106
  %v109 = vmul.f32 %v94, %v107
  %v110 = vmul.f32 %v99, %v107
  %v111 = vld [vmem:[%s3] sm:$0x1]
  %vm112 = vcmp.ne.f32.partialorder %v111, 0.0
  %v113 = vand.u32 2147483647, %v109
  %vm114 = vcmp.le.f32.partialorder %v113, 0.7853982
  %vm115 = vcmp.lt.s32.totalorder %v109, 0
  %v116 = vand.u32 %v109, 2139095040
  %v117 = vshrl.u32 %v116, 23
  %v118 = vsub.s32 %v117, 127
  %v119 = vand.u32 2147483647, %v109
  %v120 = vand.u32 %v119, 8388607
  %v121 = vor.u32 %v120, 8388608
  %v122 = vsub.s32 0, %v121
  %v123 = vadd.s32 %v118, 1
  %vm124 = vcmp.gt.s32.totalorder %v123, 0
  %v125 = vsel %vm124, %v123, 0
  %v126 = vshrl.u32 %v125, 5
  %v127 = vand.u32 %v125, 31
  %v128 = vsub.s32 32, %v127
  %v129 = vshrl.u32 683565275, %v128
  %v130 = vshll.u32 683565275, %v127
  %v131 = vshrl.u32 2475754826, %v128
  %v132 = vor.u32 %v130, %v131
  %v133 = vshll.u32 2475754826, %v127
  %v134 = vshrl.u32 2131351028, %v128
  %v135 = vor.u32 %v133, %v134
  %v136 = vshll.u32 2131351028, %v127
  %v137 = vshrl.u32 2102212464, %v128
  %v138 = vor.u32 %v136, %v137
  %v139 = vshll.u32 2102212464, %v127
  %v140 = vshrl.u32 920167782, %v128
  %v141 = vor.u32 %v139, %v140
  %v142 = vshll.u32 920167782, %v127
  %v143 = vshrl.u32 1326507024, %v128
  %v144 = vor.u32 %v142, %v143
  %vm145 = vcmp.lt.s32.totalorder %v126, 1
  %vm146 = vcmp.lt.s32.totalorder %v126, 2
  %vm147 = vcmp.lt.s32.totalorder %v126, 3
  %vm148 = vcmp.lt.s32.totalorder %v126, 4
  %v149 = vsel %vm145, %v129, %v132
  %v150 = vsel %vm148, %v138, 2102212464
  %v151 = vsel %vm147, %v135, %v150
  %v152 = vsel %vm146, %v149, %v151
  %v153 = vsel %vm145, %v132, %v135
  %v154 = vsel %vm148, %v141, 920167782
  %v155 = vsel %vm147, %v138, %v154
  %v156 = vsel %vm146, %v153, %v155
  %v157 = vsel %vm145, %v135, %v138
  %v158 = vsel %vm148, %v144, 1326507024
  %v159 = vsel %vm147, %v141, %v158
  %v160 = vsel %vm146, %v157, %v159
  %v161 = vshll.u32 %v121, 8
  %v162 = vmul.u32.u64.compose %v161, %v160
  %v163 = vextract.low.u32 %v162
  %v164 = vextract.high.u32 %v162
  %v165 = vmul.u32.u64.compose %v161, %v156
  %v166 = vextract.low.u32 %v165
  %v167 = vextract.high.u32 %v165
  %v168 = vmul.u32 %v161, %v152
  %v169 = vadd.s32 %v164, %v166
  %vm170 = vc.u32 %v164, %v166
  %v171 = vadd.s32 %v167, 1
  %v172 = vsel %vm170, %v171, %v167
  %v173 = vadd.s32 %v168, %v172
  %v174 = vadd.s32 %v173, 536870912
  %v175 = vshrl.u32 %v174, 30
  %v176 = vshll.u32 %v175, 30
  %v177 = vsub.s32 %v173, %v176
  %vm178 = vcmp.lt.s32.totalorder %v177, 0
  %v179 = vsub.s32 0, %v177
  %v180 = vsel %vm178, %v179, %v177
  %v181 = vclz %v180
  %v182 = vsub.s32 %v181, 2
  %vm183 = vcmp.gt.s32.totalorder 0, %v182
  %v184 = vsel %vm183, 0, %v182
  %v185 = vsub.s32 32, %v184
  %v186 = vshll.u32 %v177, %v184
  %v187 = vshrl.u32 %v169, %v185
  %v188 = vor.u32 %v186, %v187
  %v189 = vsub.s32 4294967266, %v184
  %v190 = vadd.s32 %v189, 127
  %v191 = vshll.u32 %v190, 23
  %v192 = vor.u32 4788187, %v191
  %v193 = vand.u32 2147483647, %v192
  %v195 = vcvt.s32.f32 %v188
  %v196 = vmul.f32 %v195, %v193
  %v197 = vxor.u32 %v196, 2147483648
  %v198 = vsel %vm115, %v197, %v196
  %v199 = vsub.s32 4, %v175
  %v200 = vsel %vm115, %v199, %v175
  %v201 = vsel %vm114, %v109, %v198
  %v202 = vsel %vm114, 0, %v200
  %v203 = vcosq.f32.pop %v201
  %v204 = vsinq.f32.pop %v201
  %vm205 = vweird.f32 %v109
  %v206 = vand.u32 %v202, 3
  %vm207 = vcmp.lt.s32.totalorder %v206, 2
  %vm208 = vcmp.eq.s32.totalorder %v206, 0
  %v209 = vxor.u32 %v204, 2147483648
  %v210 = vsel %vm208, %v203, %v209
  %vm211 = vcmp.eq.s32.totalorder %v206, 2
  %v212 = vxor.u32 %v203, 2147483648
  %v213 = vsel %vm211, %v212, %v204
  %v214 = vsel %vm207, %v210, %v213
  %v215 = vsel %vm205, nan, %v214
  %v216 = vand.u32 2147483647, %v110
  %vm217 = vcmp.le.f32.partialorder %v216, 0.7853982
  %vm218 = vcmp.lt.s32.totalorder %v110, 0
  %v219 = vand.u32 %v110, 2139095040
  %v220 = vshrl.u32 %v219, 23
  %v221 = vsub.s32 %v220, 127
  %v222 = vand.u32 2147483647, %v110
  %v223 = vand.u32 %v222, 8388607
  %v224 = vor.u32 %v223, 8388608
  %v225 = vsub.s32 0, %v224
  %v226 = vadd.s32 %v221, 1
  %vm227 = vcmp.gt.s32.totalorder %v226, 0
  %v228 = vsel %vm227, %v226, 0
  %v229 = vshrl.u32 %v228, 5
  %v230 = vand.u32 %v228, 31
  %v231 = vsub.s32 32, %v230
  %v232 = vshrl.u32 683565275, %v231
  %v233 = vshll.u32 683565275, %v230
  %v234 = vshrl.u32 2475754826, %v231
  %v235 = vor.u32 %v233, %v234
  %v236 = vshll.u32 2475754826, %v230
  %v237 = vshrl.u32 2131351028, %v231
  %v238 = vor.u32 %v236, %v237
  %v239 = vshll.u32 2131351028, %v230
  %v240 = vshrl.u32 2102212464, %v231
  %v241 = vor.u32 %v239, %v240
  %v242 = vshll.u32 2102212464, %v230
  %v243 = vshrl.u32 920167782, %v231
  %v244 = vor.u32 %v242, %v243
  %v245 = vshll.u32 920167782, %v230
  %v246 = vshrl.u32 1326507024, %v231
  %v247 = vor.u32 %v245, %v246
  %vm248 = vcmp.lt.s32.totalorder %v229, 1
  %vm249 = vcmp.lt.s32.totalorder %v229, 2
  %vm250 = vcmp.lt.s32.totalorder %v229, 3
  %vm251 = vcmp.lt.s32.totalorder %v229, 4
  %v252 = vsel %vm248, %v232, %v235
  %v253 = vsel %vm251, %v241, 2102212464
  %v254 = vsel %vm250, %v238, %v253
  %v255 = vsel %vm249, %v252, %v254
  %v256 = vsel %vm248, %v235, %v238
  %v257 = vsel %vm251, %v244, 920167782
  %v258 = vsel %vm250, %v241, %v257
  %v259 = vsel %vm249, %v256, %v258
  %v260 = vsel %vm248, %v238, %v241
  %v261 = vsel %vm251, %v247, 1326507024
  %v262 = vsel %vm250, %v244, %v261
  %v263 = vsel %vm249, %v260, %v262
  %v264 = vshll.u32 %v224, 8
  %v265 = vmul.u32.u64.compose %v264, %v263
  %v266 = vextract.low.u32 %v265
  %v267 = vextract.high.u32 %v265
  %v268 = vmul.u32.u64.compose %v264, %v259
  %v269 = vextract.low.u32 %v268
  %v270 = vextract.high.u32 %v268
  %v271 = vmul.u32 %v264, %v255
  %v272 = vadd.s32 %v267, %v269
  %vm273 = vc.u32 %v267, %v269
  %v274 = vadd.s32 %v270, 1
  %v275 = vsel %vm273, %v274, %v270
  %v276 = vadd.s32 %v271, %v275
  %v277 = vadd.s32 %v276, 536870912
  %v278 = vshrl.u32 %v277, 30
  %v279 = vshll.u32 %v278, 30
  %v280 = vsub.s32 %v276, %v279
  %vm281 = vcmp.lt.s32.totalorder %v280, 0
  %v282 = vsub.s32 0, %v280
  %v283 = vsel %vm281, %v282, %v280
  %v284 = vclz %v283
  %v285 = vsub.s32 %v284, 2
  %vm286 = vcmp.gt.s32.totalorder 0, %v285
  %v287 = vsel %vm286, 0, %v285
  %v288 = vsub.s32 32, %v287
  %v289 = vshll.u32 %v280, %v287
  %v290 = vshrl.u32 %v272, %v288
  %v291 = vor.u32 %v289, %v290
  %v292 = vsub.s32 4294967266, %v287
  %v293 = vadd.s32 %v292, 127
  %v294 = vshll.u32 %v293, 23
  %v295 = vor.u32 4788187, %v294
  %v296 = vand.u32 2147483647, %v295
  %v298 = vcvt.s32.f32 %v291
  %v299 = vmul.f32 %v298, %v296
  %v300 = vxor.u32 %v299, 2147483648
  %v301 = vsel %vm218, %v300, %v299
  %v302 = vsub.s32 4, %v278
  %v303 = vsel %vm218, %v302, %v278
  %v304 = vsel %vm217, %v110, %v301
  %v305 = vsel %vm217, 0, %v303
  %v306 = vcosq.f32.pop %v304
  %v307 = vsinq.f32.pop %v304
  %vm308 = vweird.f32 %v110
  %v309 = vand.u32 %v305, 3
  %vm310 = vcmp.lt.s32.totalorder %v309, 2
  %vm311 = vcmp.eq.s32.totalorder %v309, 0
  %v312 = vxor.u32 %v307, 2147483648
  %v313 = vsel %vm311, %v306, %v312
  %vm314 = vcmp.eq.s32.totalorder %v309, 2
  %v315 = vxor.u32 %v306, 2147483648
  %v316 = vsel %vm314, %v315, %v307
  %v317 = vsel %vm310, %v313, %v316
  %v318 = vsel %vm308, nan, %v317
  %v319 = vand.u32 2147483647, %v109
  %vm320 = vcmp.le.f32.partialorder %v319, 0.7853982
  %vm321 = vcmp.lt.s32.totalorder %v109, 0
  %v322 = vand.u32 %v109, 2139095040
  %v323 = vshrl.u32 %v322, 23
  %v324 = vsub.s32 %v323, 127
  %v325 = vand.u32 2147483647, %v109
  %v326 = vand.u32 %v325, 8388607
  %v327 = vor.u32 %v326, 8388608
  %v328 = vsub.s32 0, %v327
  %v329 = vadd.s32 %v324, 1
  %vm330 = vcmp.gt.s32.totalorder %v329, 0
  %v331 = vsel %vm330, %v329, 0
  %v332 = vshrl.u32 %v331, 5
  %v333 = vand.u32 %v331, 31
  %v334 = vsub.s32 32, %v333
  %v335 = vshrl.u32 683565275, %v334
  %v336 = vshll.u32 683565275, %v333
  %v337 = vshrl.u32 2475754826, %v334
  %v338 = vor.u32 %v336, %v337
  %v339 = vshll.u32 2475754826, %v333
  %v340 = vshrl.u32 2131351028, %v334
  %v341 = vor.u32 %v339, %v340
  %v342 = vshll.u32 2131351028, %v333
  %v343 = vshrl.u32 2102212464, %v334
  %v344 = vor.u32 %v342, %v343
  %v345 = vshll.u32 2102212464, %v333
  %v346 = vshrl.u32 920167782, %v334
  %v347 = vor.u32 %v345, %v346
  %v348 = vshll.u32 920167782, %v333
  %v349 = vshrl.u32 1326507024, %v334
  %v350 = vor.u32 %v348, %v349
  %vm351 = vcmp.lt.s32.totalorder %v332, 1
  %vm352 = vcmp.lt.s32.totalorder %v332, 2
  %vm353 = vcmp.lt.s32.totalorder %v332, 3
  %vm354 = vcmp.lt.s32.totalorder %v332, 4
  %v355 = vsel %vm351, %v335, %v338
  %v356 = vsel %vm354, %v344, 2102212464
  %v357 = vsel %vm353, %v341, %v356
  %v358 = vsel %vm352, %v355, %v357
  %v359 = vsel %vm351, %v338, %v341
  %v360 = vsel %vm354, %v347, 920167782
  %v361 = vsel %vm353, %v344, %v360
  %v362 = vsel %vm352, %v359, %v361
  %v363 = vsel %vm351, %v341, %v344
  %v364 = vsel %vm354, %v350, 1326507024
  %v365 = vsel %vm353, %v347, %v364
  %v366 = vsel %vm352, %v363, %v365
  %v367 = vshll.u32 %v327, 8
  %v368 = vmul.u32.u64.compose %v367, %v366
  %v369 = vextract.low.u32 %v368
  %v370 = vextract.high.u32 %v368
  %v371 = vmul.u32.u64.compose %v367, %v362
  %v372 = vextract.low.u32 %v371
  %v373 = vextract.high.u32 %v371
  %v374 = vmul.u32 %v367, %v358
  %v375 = vadd.s32 %v370, %v372
  %vm376 = vc.u32 %v370, %v372
  %v377 = vadd.s32 %v373, 1
  %v378 = vsel %vm376, %v377, %v373
  %v379 = vadd.s32 %v374, %v378
  %v380 = vadd.s32 %v379, 536870912
  %v381 = vshrl.u32 %v380, 30
  %v382 = vshll.u32 %v381, 30
  %v383 = vsub.s32 %v379, %v382
  %vm384 = vcmp.lt.s32.totalorder %v383, 0
  %v385 = vsub.s32 0, %v383
  %v386 = vsel %vm384, %v385, %v383
  %v387 = vclz %v386
  %v388 = vsub.s32 %v387, 2
  %vm389 = vcmp.gt.s32.totalorder 0, %v388
  %v390 = vsel %vm389, 0, %v388
  %v391 = vsub.s32 32, %v390
  %v392 = vshll.u32 %v383, %v390
  %v393 = vshrl.u32 %v375, %v391
  %v394 = vor.u32 %v392, %v393
  %v395 = vsub.s32 4294967266, %v390
  %v396 = vadd.s32 %v395, 127
  %v397 = vshll.u32 %v396, 23
  %v398 = vor.u32 4788187, %v397
  %v399 = vand.u32 2147483647, %v398
  %v401 = vcvt.s32.f32 %v394
  %v402 = vmul.f32 %v401, %v399
  %v403 = vxor.u32 %v402, 2147483648
  %v404 = vsel %vm321, %v403, %v402
  %v405 = vsub.s32 4, %v381
  %v406 = vsel %vm321, %v405, %v381
  %v407 = vsel %vm320, %v109, %v404
  %v408 = vsel %vm320, 0, %v406
  %v409 = vcosq.f32.pop %v407
  %v410 = vsinq.f32.pop %v407
  %vm411 = vweird.f32 %v109
  %v412 = vadd.s32 %v408, 3
  %v413 = vand.u32 %v412, 3
  %vm414 = vcmp.lt.s32.totalorder %v413, 2
  %vm415 = vcmp.eq.s32.totalorder %v413, 0
  %v416 = vxor.u32 %v410, 2147483648
  %v417 = vsel %vm415, %v409, %v416
  %vm418 = vcmp.eq.s32.totalorder %v413, 2
  %v419 = vxor.u32 %v409, 2147483648
  %v420 = vsel %vm418, %v419, %v410
  %v421 = vsel %vm414, %v417, %v420
  %v422 = vsel %vm411, nan, %v421
  %v423 = vand.u32 2147483647, %v110
  %vm424 = vcmp.le.f32.partialorder %v423, 0.7853982
  %vm425 = vcmp.lt.s32.totalorder %v110, 0
  %v426 = vand.u32 %v110, 2139095040
  %v427 = vshrl.u32 %v426, 23
  %v428 = vsub.s32 %v427, 127
  %v429 = vand.u32 2147483647, %v110
  %v430 = vand.u32 %v429, 8388607
  %v431 = vor.u32 %v430, 8388608
  %v432 = vsub.s32 0, %v431
  %v433 = vadd.s32 %v428, 1
  %vm434 = vcmp.gt.s32.totalorder %v433, 0
  %v435 = vsel %vm434, %v433, 0
  %v436 = vshrl.u32 %v435, 5
  %v437 = vand.u32 %v435, 31
  %v438 = vsub.s32 32, %v437
  %v439 = vshrl.u32 683565275, %v438
  %v440 = vshll.u32 683565275, %v437
  %v441 = vshrl.u32 2475754826, %v438
  %v442 = vor.u32 %v440, %v441
  %v443 = vshll.u32 2475754826, %v437
  %v444 = vshrl.u32 2131351028, %v438
  %v445 = vor.u32 %v443, %v444
  %v446 = vshll.u32 2131351028, %v437
  %v447 = vshrl.u32 2102212464, %v438
  %v448 = vor.u32 %v446, %v447
  %v449 = vshll.u32 2102212464, %v437
  %v450 = vshrl.u32 920167782, %v438
  %v451 = vor.u32 %v449, %v450
  %v452 = vshll.u32 920167782, %v437
  %v453 = vshrl.u32 1326507024, %v438
  %v454 = vor.u32 %v452, %v453
  %vm455 = vcmp.lt.s32.totalorder %v436, 1
  %vm456 = vcmp.lt.s32.totalorder %v436, 2
  %vm457 = vcmp.lt.s32.totalorder %v436, 3
  %vm458 = vcmp.lt.s32.totalorder %v436, 4
  %v459 = vsel %vm455, %v439, %v442
  %v460 = vsel %vm458, %v448, 2102212464
  %v461 = vsel %vm457, %v445, %v460
  %v462 = vsel %vm456, %v459, %v461
  %v463 = vsel %vm455, %v442, %v445
  %v464 = vsel %vm458, %v451, 920167782
  %v465 = vsel %vm457, %v448, %v464
  %v466 = vsel %vm456, %v463, %v465
  %v467 = vsel %vm455, %v445, %v448
  %v468 = vsel %vm458, %v454, 1326507024
  %v469 = vsel %vm457, %v451, %v468
  %v470 = vsel %vm456, %v467, %v469
  %v471 = vshll.u32 %v431, 8
  %v472 = vmul.u32.u64.compose %v471, %v470
  %v473 = vextract.low.u32 %v472
  %v474 = vextract.high.u32 %v472
  %v475 = vmul.u32.u64.compose %v471, %v466
  %v476 = vextract.low.u32 %v475
  %v477 = vextract.high.u32 %v475
  %v478 = vmul.u32 %v471, %v462
  %v479 = vadd.s32 %v474, %v476
  %vm480 = vc.u32 %v474, %v476
  %v481 = vadd.s32 %v477, 1
  %v482 = vsel %vm480, %v481, %v477
  %v483 = vadd.s32 %v478, %v482
  %v484 = vadd.s32 %v483, 536870912
  %v485 = vshrl.u32 %v484, 30
  %v486 = vshll.u32 %v485, 30
  %v487 = vsub.s32 %v483, %v486
  %vm488 = vcmp.lt.s32.totalorder %v487, 0
  %v489 = vsub.s32 0, %v487
  %v490 = vsel %vm488, %v489, %v487
  %v491 = vclz %v490
  %v492 = vsub.s32 %v491, 2
  %vm493 = vcmp.gt.s32.totalorder 0, %v492
  %v494 = vsel %vm493, 0, %v492
  %v495 = vsub.s32 32, %v494
  %v496 = vshll.u32 %v487, %v494
  %v497 = vshrl.u32 %v479, %v495
  %v498 = vor.u32 %v496, %v497
  %v499 = vsub.s32 4294967266, %v494
  %v500 = vadd.s32 %v499, 127
  %v501 = vshll.u32 %v500, 23
  %v502 = vor.u32 4788187, %v501
  %v503 = vand.u32 2147483647, %v502
  %v505 = vcvt.s32.f32 %v498
  %v506 = vmul.f32 %v505, %v503
  %v507 = vxor.u32 %v506, 2147483648
  %v508 = vsel %vm425, %v507, %v506
  %v509 = vsub.s32 4, %v485
  %v510 = vsel %vm425, %v509, %v485
  %v511 = vsel %vm424, %v110, %v508
  %v512 = vsel %vm424, 0, %v510
  %v513 = vcosq.f32.pop %v511
  %v514 = vsinq.f32.pop %v511
  %vm515 = vweird.f32 %v110
  %v516 = vadd.s32 %v512, 3
  %v517 = vand.u32 %v516, 3
  %vm518 = vcmp.lt.s32.totalorder %v517, 2
  %vm519 = vcmp.eq.s32.totalorder %v517, 0
  %v520 = vxor.u32 %v514, 2147483648
  %v521 = vsel %vm519, %v513, %v520
  %vm522 = vcmp.eq.s32.totalorder %v517, 2
  %v523 = vxor.u32 %v513, 2147483648
  %v524 = vsel %vm522, %v523, %v514
  %v525 = vsel %vm518, %v521, %v524
  %v526 = vsel %vm515, nan, %v525
  %v527 = vsel %vm112, 1, 0
  %v528 = vlaneseq
  %v529 = vshrl.u32 %v528, 7
  %v530 = vsub.s32 0, %v529
  %v531 = vrot.slane %v527, %v530
  %vm532 = vcmp.eq.s32.totalorder %v531, 1
  %v533 = vsel %vm532, %v215, %v422
  %v534 = vsel %vm532, %v318, %v526
  %535 = vst [vmem:[%s4] sm:$0xff] %v533
  %536 = vst [vmem:[%s4 + $0x8] sm:$0xff] %v534
  %p537 = scmp.eq.s32.totalorder 0, 0
  // Predicated region
  $region18: #{_compute_embedding.1} parent=0 // pred_check
    %p538 = pneg %p537
  $region19: #{_compute_embedding.1} parent=0 // pred_check_branch
    %540 = sbr.rel (%p538) target = $region21
  $region20: #{_compute_embedding.1} parent=0 // pred_region
    %vm541 = vcmask 254080
    %542 = vst.msk [vmem:[%s4] sm:$0x1] %vm541, 0.0
  $region21: #{_compute_embedding.1} parent=0 // pred_fallthru
    _
  // Predicated region
  $region22: #{_compute_embedding.1} parent=0 // pred_check
    _
  $region23: #{_compute_embedding.1} parent=0 // pred_check_branch
    %544 = sbr.rel (0) target = $region25
  $region24: #{_compute_embedding.1} parent=0 // pred_region
    _
  $region25: #{_compute_embedding.1} parent=0 // pred_fallthru
    _
  // Predicated region
  $region26: #{_compute_embedding.1} parent=0 // pred_check
    _
  $region27: #{_compute_embedding.1} parent=0 // pred_check_branch
    %546 = sbr.rel (0) target = $region29
  $region28: #{_compute_embedding.1} parent=0 // pred_region
    _
  $region29: #{_compute_embedding.1} parent=0 // pred_fallthru
    _

</llo_original>
